<compile_context>
chip_gen: v7x
topology: tpu7x:2x2x1
jax: 0.10.0
libtpu: 0.0.40
codegen_flags: <defaults>
</compile_context>

<pallas_src>
import functools

import jax
import jax.numpy as jnp
import numpy as np
from jax.experimental import pallas as pl
from jax.experimental.pallas import tpu as pltpu


def _cross_attn_kernel(tok_ref, ctx_ref, wq_ref, wk_ref, wv_ref, o_ref, *, scale):
    # tok_ref: (Bblk, Tq, Hd)   ctx_ref: (Bblk, S, Cd)
    # wq_ref:  (Hd, E)          wk_ref:  (Cd, E)        wv_ref: (Cd, Hv)
    bblk, tq, hd = tok_ref.shape
    _, s, cd = ctx_ref.shape
    e_dim = wq_ref.shape[1]
    hv = wv_ref.shape[1]

    tok = tok_ref[...]                       # keep native dtype (f32 or bf16)
    ctx = ctx_ref[...]
    dt = tok.dtype

    # ---- fused projections: one MXU GEMM per weight over all batch*seq rows ----
    tok2 = tok.reshape(bblk * tq, hd)        # (Bblk*Tq, Hd)
    ctx2 = ctx.reshape(bblk * s, cd)         # (Bblk*S,  Cd)
    q = jnp.dot(tok2, wq_ref[...], preferred_element_type=jnp.float32)   # (Bblk*Tq, E) f32 acc
    k = jnp.dot(ctx2, wk_ref[...], preferred_element_type=jnp.float32)   # (Bblk*S,  E)
    v = jnp.dot(ctx2, wv_ref[...], preferred_element_type=jnp.float32)   # (Bblk*S,  Hv)

    # Fold 1/sqrt(embed_dim) into Q once (cheaper than scaling the (T,S) scores).
    q = (q * scale).astype(dt).reshape(bblk, tq, e_dim)
    k = k.astype(dt).reshape(bblk, s, e_dim)
    v = v.astype(dt).reshape(bblk, s, hv)

    # ---- scores: contract last axes directly (no .T / XLU transpose) ----
    scores = jnp.einsum("bte,bse->bts", q, k,
                        preferred_element_type=jnp.float32)              # (Bblk, Tq, S) f32

    # ---- numerically stable softmax over S, in f32 ----
    m = jnp.max(scores, axis=-1, keepdims=True)
    ex = jnp.exp(scores - m)
    denom = jnp.sum(ex, axis=-1, keepdims=True)
    inv = pl.reciprocal(denom, approx=True)          # EUP slot (otherwise idle)
    inv = inv * (2.0 - denom * inv)                  # one Newton step -> full f32 accuracy
    attn = ex * inv

    # ---- context vectors ----
    out = jnp.einsum("bts,bsh->bth", attn.astype(dt), v,
                     preferred_element_type=jnp.float32)                 # (Bblk, Tq, Hv)
    o_ref[...] = out.astype(o_ref.dtype)


def cross_attention_pallas(tokens, context, wq, wk, wv, embed_dim,
                           *, block_b=None, block_t=None, lane=128):
    """tokens: (B,T,Hd), context: (B,S,Cd), wq: (Hd,E), wk: (Cd,E), wv: (Cd,Hd)."""
    B, T, Hd = tokens.shape
    _, S, Cd = context.shape
    E = wq.shape[1]
    Hv = wv.shape[1]
    out_dtype = tokens.dtype

    # ---- lane-dense padding: pad feature (lane) dims to a multiple of 128 ----
    # Zero padding is exact: padded Q/K columns contribute 0 to QK^T and padded
    # V columns produce 0 output columns, which are sliced off below.
    pad = lambda n: (-n) % lane
    pHd, pE, pCd, pHv = pad(Hd), pad(E), pad(Cd), pad(Hv)
    tokens_p = jnp.pad(tokens, ((0, 0), (0, 0), (0, pHd)))
    context_p = jnp.pad(context, ((0, 0), (0, 0), (0, pCd)))
    wq_p = jnp.pad(wq, ((0, pHd), (0, pE)))
    wk_p = jnp.pad(wk, ((0, pCd), (0, pE)))
    wv_p = jnp.pad(wv, ((0, pCd), (0, pHv)))
    Hd_p, E_p, Cd_p, Hv_p = Hd + pHd, E + pE, Cd + pCd, Hv + pHv

    # ---- tiling ----
    if block_b is None:
        block_b = B                          # whole (small) batch per grid step
    if block_t is None:
        block_t = T if T <= 256 else 256     # should divide T at production sizes
    grid = (pl.cdiv(B, block_b), pl.cdiv(T, block_t))

    kernel = functools.partial(_cross_attn_kernel,
                               scale=float(1.0 / np.sqrt(embed_dim)))

    out_p = pl.pallas_call(
        kernel,
        out_shape=jax.ShapeDtypeStruct((B, T, Hv_p), out_dtype),
        grid_spec=pltpu.PrefetchScalarGridSpec(
            num_scalar_prefetch=0,
            grid=grid,
            in_specs=[
                pl.BlockSpec((block_b, block_t, Hd_p), lambda b, t: (b, t, 0)),
                pl.BlockSpec((block_b, S, Cd_p), lambda b, t: (b, 0, 0)),
                # Constant index_maps: weights are DMA'd once and kept resident
                # (Pallas skips the copy when the block index doesn't change).
                pl.BlockSpec((Hd_p, E_p), lambda b, t: (0, 0)),
                pl.BlockSpec((Cd_p, E_p), lambda b, t: (0, 0)),
                pl.BlockSpec((Cd_p, Hv_p), lambda b, t: (0, 0)),
            ],
            out_specs=pl.BlockSpec((block_b, block_t, Hv_p), lambda b, t: (b, t, 0)),
        ),
        compiler_params=pltpu.CompilerParams(
            dimension_semantics=("parallel", "parallel"),
            # Headroom for larger block_t at production shapes; safely below
            # v7x's 64 MiB physical VMEM and v5e/v6e's 128 MiB.
            vmem_limit_bytes=48 * 1024 * 1024,
        ),
    )(tokens_p, context_p, wq_p, wk_p, wv_p)

    return out_p[..., :Hv]


def cross_attention_ref(tokens, context, wq, wk, wv, embed_dim):
    q = tokens @ wq
    k = context @ wk
    v = context @ wv
    scores = jnp.einsum("BTH,BSH->BTS", q, k) / np.sqrt(embed_dim)
    attn = jax.nn.softmax(scores, axis=-1)
    return jnp.einsum("BTS,BSH->BTH", attn, v)


def make_weights(key, hidden_dim, embed_dim, context_dim=None):
    """Deterministic weights, PyTorch Linear(in,out,bias=False) semantics.

    nn.Linear stores weight (out,in); we build (out,in) and transpose to (in,out)
    so the kernel computes x @ W, identical to x @ weight.T in PyTorch.
    """
    in_kv = hidden_dim if context_dim is None else context_dim
    k1, k2, k3 = jax.random.split(key, 3)

    def init(k, out_f, in_f):
        bound = 1.0 / np.sqrt(in_f)
        w = jax.random.uniform(k, (out_f, in_f), jnp.float32, -bound, bound)
        return w.T  # (in, out)

    wq = init(k1, embed_dim, hidden_dim)
    wk = init(k2, embed_dim, in_kv)
    wv = init(k3, hidden_dim, in_kv)
    return wq, wk, wv


if __name__ == "__main__":
    key = jax.random.PRNGKey(0)
    B, T, S = 2, 16, 8
    hidden_dim, embed_dim, context_dim = 32, 32, 24

    k_tok, k_ctx, k_w1, k_w2 = jax.random.split(key, 4)
    tokens = jax.random.normal(k_tok, (B, T, hidden_dim), jnp.float32)
    context = jax.random.normal(k_ctx, (B, S, context_dim), jnp.float32)

    # --- cross-attention case (context_dim given), f32 ---
    wq, wk, wv = make_weights(k_w1, hidden_dim, embed_dim, context_dim)
    out_cross = cross_attention_pallas(tokens, context, wq, wk, wv, embed_dim)
    jax.block_until_ready(out_cross)
    ref_cross = cross_attention_ref(tokens, context, wq, wk, wv, embed_dim)
    np.testing.assert_allclose(np.asarray(out_cross), np.asarray(ref_cross),
                               rtol=1e-4, atol=1e-4)

    # --- self-attention case (context_dim=None -> K,V from tokens), f32 ---
    wq_s, wk_s, wv_s = make_weights(k_w2, hidden_dim, embed_dim, None)
    out_self = cross_attention_pallas(tokens, tokens, wq_s, wk_s, wv_s, embed_dim)
    jax.block_until_ready(out_self)
    ref_self = cross_attention_ref(tokens, tokens, wq_s, wk_s, wv_s, embed_dim)
    np.testing.assert_allclose(np.asarray(out_self), np.asarray(ref_self),
                               rtol=1e-4, atol=1e-4)

    # --- cross-attention with bf16 operands (f32 accumulation inside kernel) ---
    to_bf16 = lambda x: x.astype(jnp.bfloat16)
    out_bf16 = cross_attention_pallas(to_bf16(tokens), to_bf16(context),
                                      to_bf16(wq), to_bf16(wk), to_bf16(wv),
                                      embed_dim)
    jax.block_until_ready(out_bf16)
    np.testing.assert_allclose(np.asarray(out_bf16.astype(jnp.float32)),
                               np.asarray(ref_cross), rtol=5e-2, atol=5e-2)

    print("KERNEL_OK")
</pallas_src>

<mosaic_0001>
module attributes {stable_mosaic.version = 11 : i64} {
  func.func @_cross_attn_kernel(%arg0: i32, %arg1: i32, %arg2: memref<2x16x128xf32, #tpu.memory_space<vmem>>, %arg3: memref<2x8x128xf32, #tpu.memory_space<vmem>>, %arg4: memref<128x128xf32, #tpu.memory_space<vmem>>, %arg5: memref<128x128xf32, #tpu.memory_space<vmem>>, %arg6: memref<128x128xf32, #tpu.memory_space<vmem>>, %arg7: memref<2x16x128xf32, #tpu.memory_space<vmem>>) attributes {dimension_semantics = [#tpu.dimension_semantics<parallel>, #tpu.dimension_semantics<parallel>], iteration_bounds = array<i64: 1, 1>, scalar_prefetch = 0 : i64, scratch_operands = 0 : i64, tpu.core_type = #tpu.core_type<tc>, window_params = [{transform_indices = @transform_0, window_bounds = array<i64: 2, 16, 128>}, {transform_indices = @transform_1, window_bounds = array<i64: 2, 8, 128>}, {pipeline_mode = #tpu.pipeline_mode<synchronous>, transform_indices = @transform_2, window_bounds = array<i64: 128, 128>}, {pipeline_mode = #tpu.pipeline_mode<synchronous>, transform_indices = @transform_3, window_bounds = array<i64: 128, 128>}, {pipeline_mode = #tpu.pipeline_mode<synchronous>, transform_indices = @transform_4, window_bounds = array<i64: 128, 128>}, {transform_indices = @transform_5, window_bounds = array<i64: 2, 16, 128>}]} {
    %c0 = arith.constant 0 : index
    %c0_0 = arith.constant 0 : index
    %c0_1 = arith.constant 0 : index
    %0 = vector.load %arg2[%c0, %c0_0, %c0_1] : memref<2x16x128xf32, #tpu.memory_space<vmem>>, vector<2x16x128xf32>
    %c0_2 = arith.constant 0 : index
    %c0_3 = arith.constant 0 : index
    %c0_4 = arith.constant 0 : index
    %1 = vector.load %arg3[%c0_2, %c0_3, %c0_4] : memref<2x8x128xf32, #tpu.memory_space<vmem>>, vector<2x8x128xf32>
    %2 = vector.shape_cast %0 : vector<2x16x128xf32> to vector<32x128xf32>
    %3 = vector.shape_cast %1 : vector<2x8x128xf32> to vector<16x128xf32>
    %c0_5 = arith.constant 0 : index
    %c0_6 = arith.constant 0 : index
    %4 = vector.load %arg4[%c0_5, %c0_6] : memref<128x128xf32, #tpu.memory_space<vmem>>, vector<128x128xf32>
    %cst = arith.constant dense<0.000000e+00> : vector<32x128xf32>
    %5 = tpu.matmul %2, %4, %cst {dimension_numbers = #tpu.dot_dimension_numbers<[1], [0], [0], [1], [0, 0, 1, 1], [], []>} : vector<32x128xf32>, vector<128x128xf32>, vector<32x128xf32> -> vector<32x128xf32>
    %c0_7 = arith.constant 0 : index
    %c0_8 = arith.constant 0 : index
    %6 = vector.load %arg5[%c0_7, %c0_8] : memref<128x128xf32, #tpu.memory_space<vmem>>, vector<128x128xf32>
    %cst_9 = arith.constant dense<0.000000e+00> : vector<16x128xf32>
    %7 = tpu.matmul %3, %6, %cst_9 {dimension_numbers = #tpu.dot_dimension_numbers<[1], [0], [0], [1], [0, 0, 1, 1], [], []>} : vector<16x128xf32>, vector<128x128xf32>, vector<16x128xf32> -> vector<16x128xf32>
    %c0_10 = arith.constant 0 : index
    %c0_11 = arith.constant 0 : index
    %8 = vector.load %arg6[%c0_10, %c0_11] : memref<128x128xf32, #tpu.memory_space<vmem>>, vector<128x128xf32>
    %cst_12 = arith.constant dense<0.000000e+00> : vector<16x128xf32>
    %9 = tpu.matmul %3, %8, %cst_12 {dimension_numbers = #tpu.dot_dimension_numbers<[1], [0], [0], [1], [0, 0, 1, 1], [], []>} : vector<16x128xf32>, vector<128x128xf32>, vector<16x128xf32> -> vector<16x128xf32>
    %cst_13 = arith.constant 0.176776692 : f32
    %10 = vector.broadcast %cst_13 : f32 to vector<32x128xf32>
    %11 = arith.mulf %5, %10 : vector<32x128xf32>
    %12 = vector.shape_cast %11 : vector<32x128xf32> to vector<2x16x128xf32>
    %13 = vector.shape_cast %7 : vector<16x128xf32> to vector<2x8x128xf32>
    %14 = vector.shape_cast %9 : vector<16x128xf32> to vector<2x8x128xf32>
    "tpu.trace_start"() <{level = 10 : i32, message = "bte,bse->bts"}> : () -> ()
    %cst_14 = arith.constant dense<0.000000e+00> : vector<2x16x8xf32>
    %15 = tpu.matmul %12, %13, %cst_14 {dimension_numbers = #tpu.dot_dimension_numbers<[2], [2], [1], [1], [0, 0, 0, 1, 1, 1], [0], [0]>} : vector<2x16x128xf32>, vector<2x8x128xf32>, vector<2x16x8xf32> -> vector<2x16x8xf32>
    "tpu.trace_stop"() : () -> ()
    %cst_15 = arith.constant dense<0xFF800000> : vector<2x16xf32>
    %16 = vector.multi_reduction <maximumf>, %15, %cst_15 [2] : vector<2x16x8xf32> to vector<2x16xf32>
    %17 = vector.shape_cast %16 : vector<2x16xf32> to vector<2x16x1xf32>
    %18 = vector.broadcast %17 : vector<2x16x1xf32> to vector<2x16x8xf32>
    %19 = arith.subf %15, %18 : vector<2x16x8xf32>
    %20 = math.exp %19 : vector<2x16x8xf32>
    %cst_16 = arith.constant dense<0.000000e+00> : vector<2x16xf32>
    %21 = vector.multi_reduction <add>, %20, %cst_16 [2] : vector<2x16x8xf32> to vector<2x16xf32>
    %22 = vector.shape_cast %21 : vector<2x16xf32> to vector<2x16x1xf32>
    %23 = tpu.reciprocal %22 {approx = true} : vector<2x16x1xf32> -> vector<2x16x1xf32>
    %24 = arith.mulf %22, %23 : vector<2x16x1xf32>
    %cst_17 = arith.constant 2.000000e+00 : f32
    %25 = vector.broadcast %cst_17 : f32 to vector<2x16x1xf32>
    %26 = arith.subf %25, %24 : vector<2x16x1xf32>
    %27 = arith.mulf %23, %26 : vector<2x16x1xf32>
    %28 = vector.broadcast %27 : vector<2x16x1xf32> to vector<2x16x8xf32>
    %29 = arith.mulf %20, %28 : vector<2x16x8xf32>
    "tpu.trace_start"() <{level = 10 : i32, message = "bts,bsh->bth"}> : () -> ()
    %cst_18 = arith.constant dense<0.000000e+00> : vector<2x16x128xf32>
    %30 = tpu.matmul %29, %14, %cst_18 {dimension_numbers = #tpu.dot_dimension_numbers<[2], [1], [1], [2], [0, 0, 0, 1, 1, 2], [0], [0]>} : vector<2x16x8xf32>, vector<2x8x128xf32>, vector<2x16x128xf32> -> vector<2x16x128xf32>
    "tpu.trace_stop"() : () -> ()
    %c0_19 = arith.constant 0 : index
    %c0_20 = arith.constant 0 : index
    %c0_21 = arith.constant 0 : index
    %31 = vector.load %arg7[%c0_19, %c0_20, %c0_21] : memref<2x16x128xf32, #tpu.memory_space<vmem>>, vector<2x16x128xf32>
    tpu.vector_store %arg7[%c0_19, %c0_20, %c0_21], %30 {strides = array<i32>} : memref<2x16x128xf32, #tpu.memory_space<vmem>>, vector<2x16x128xf32>,
    return
  }
  func.func @transform_0(%arg0: i32, %arg1: i32) -> (i32, i32, i32) {
    %c0_i32 = arith.constant 0 : i32
    %c0_i32_0 = arith.constant 0 : i32
    return %arg0, %arg1, %c0_i32 : i32, i32, i32
  }
  func.func @transform_1(%arg0: i32, %arg1: i32) -> (i32, i32, i32) {
    %c0_i32 = arith.constant 0 : i32
    %c0_i32_0 = arith.constant 0 : i32
    %c0_i32_1 = arith.constant 0 : i32
    return %arg0, %c0_i32, %c0_i32_0 : i32, i32, i32
  }
  func.func @transform_2(%arg0: i32, %arg1: i32) -> (i32, i32) {
    %c0_i32 = arith.constant 0 : i32
    %c0_i32_0 = arith.constant 0 : i32
    %c0_i32_1 = arith.constant 0 : i32
    return %c0_i32, %c0_i32_0 : i32, i32
  }
  func.func @transform_3(%arg0: i32, %arg1: i32) -> (i32, i32) {
    %c0_i32 = arith.constant 0 : i32
    %c0_i32_0 = arith.constant 0 : i32
    %c0_i32_1 = arith.constant 0 : i32
    return %c0_i32, %c0_i32_0 : i32, i32
  }
  func.func @transform_4(%arg0: i32, %arg1: i32) -> (i32, i32) {
    %c0_i32 = arith.constant 0 : i32
    %c0_i32_0 = arith.constant 0 : i32
    %c0_i32_1 = arith.constant 0 : i32
    return %c0_i32, %c0_i32_0 : i32, i32
  }
  func.func @transform_5(%arg0: i32, %arg1: i32) -> (i32, i32, i32) {
    %c0_i32 = arith.constant 0 : i32
    %c0_i32_0 = arith.constant 0 : i32
    return %arg0, %arg1, %c0_i32 : i32, i32, i32
  }
}

</mosaic_0001>

<llo_original>
// kernel: tpu_custom_call.1
$region0: #{tpu_custom_call.1}
  #allocation0 [shape = 'u32[]', space=smem, size = 0x4, offset = 0x4, fixed_abs, tag = 'smem constant byte address 0x4 - core index']
  #allocation1 [shape = 'u32[144,128]{1,0:T(1,128)}', space=vmem, size = 0x12000, scoped, tag = 'internal scratch']
  %s0 = inlined_call_operand.hbm [shape: f32[2,16,128], index: 0, kind: input, shape index: {}]
  %s1 = inlined_call_operand.hbm [shape: f32[2,8,128], index: 1, kind: input, shape index: {}]
  %s2 = inlined_call_operand.hbm [shape: f32[128,128], index: 2, kind: input, shape index: {}]
  %s3 = inlined_call_operand.hbm [shape: f32[128,128], index: 3, kind: input, shape index: {}]
  %s4 = inlined_call_operand.hbm [shape: f32[128,128], index: 4, kind: input, shape index: {}]
  %s5 = inlined_call_operand.hbm [shape: f32[2,16,128], index: 5, kind: output, shape index: {}]
  %s6 = sld [smem:[#allocation0]]
  $region50: #{tpu_custom_call.1} parent=0
    _
  %s8 = ssub.s32 1, %s6
  %s9 = scalar_select 0, %s8, %s6
  $region1: #{tpu_custom_call.1} parent=0
    #allocation2 [shape = 'u8[16384]{0}', space=vmem, size = 0x4000, scoped, tag = 'input window, operand 0, single buffered']
    #allocation3 [shape = 's32[1]{0}', space=sflag, size = 0x4, scoped, tag = 'scoped memory for tpu_custom_call.1']
    #allocation4 [shape = 's32[1]{0}', space=sflag, size = 0x4, scoped, tag = 'scoped memory for tpu_custom_call.1']
    #allocation5 [shape = 'u8[8192]{0}', space=vmem, size = 0x2000, scoped, tag = 'input window, operand 1, single buffered']
    #allocation6 [shape = 's32[1]{0}', space=sflag, size = 0x4, scoped, tag = 'scoped memory for tpu_custom_call.1']
    #allocation7 [shape = 'u8[65536]{0}', space=vmem, size = 0x10000, scoped, tag = 'input window, operand 2, single buffered']
    #allocation8 [shape = 'u8[65536]{0}', space=vmem, size = 0x10000, scoped, tag = 'input window, operand 3, single buffered']
    #allocation9 [shape = 's32[1]{0}', space=sflag, size = 0x4, scoped, tag = 'scoped memory for tpu_custom_call.1']
    #allocation10 [shape = 'u8[65536]{0}', space=vmem, size = 0x10000, scoped, tag = 'input window, operand 4, single buffered']
    #allocation11 [shape = 'u8[16384]{0}', space=vmem, size = 0x4000, scoped, tag = 'output window, operand 0, single buffered']
    %10 = vsyncpa [#allocation3], 0
    %11 = vsyncpa [#allocation6], 0
    %12 = vsyncpa [#allocation9], 0
    %13 = vsyncpa [#allocation4], 0
    // Predicated region
    $region2: #{tpu_custom_call.1} parent=1 // pred_check
      _
    $region3: #{tpu_custom_call.1} parent=1 // pred_check_branch
      %15 = sbr.rel (0) target = $region5
    $region4: #{tpu_custom_call.1} parent=1 // pred_region
      %s17 = ssub.s32 512, 512
      %18 = vsyncadd [#allocation3], %s17
      %s19 = sshll.u32 [#allocation2], 4
      %s20 = int_to_ptr.vmem [resolvable:$true] %s19
      %25 = dma.hbm_to_vmem [thread:$0]  %s0, 512, %s20, [#allocation3], 128, 128, 8
    $region5: #{tpu_custom_call.1} parent=1 // pred_fallthru
      _
    // Predicated region
    $region6: #{tpu_custom_call.1} parent=1 // pred_check
      _
    $region7: #{tpu_custom_call.1} parent=1 // pred_check_branch
      %27 = sbr.rel (0) target = $region9
    $region8: #{tpu_custom_call.1} parent=1 // pred_region
      %s29 = ssub.s32 256, 256
      %30 = vsyncadd [#allocation6], %s29
      %s31 = sshll.u32 [#allocation5], 4
      %s32 = int_to_ptr.vmem [resolvable:$true] %s31
      %37 = dma.hbm_to_vmem [thread:$0]  %s1, 256, %s32, [#allocation6], 128, 128, 8
    $region9: #{tpu_custom_call.1} parent=1 // pred_fallthru
      _
    // Predicated region
    $region10: #{tpu_custom_call.1} parent=1 // pred_check
      _
    $region11: #{tpu_custom_call.1} parent=1 // pred_check_branch
      %39 = sbr.rel (0) target = $region13
    $region12: #{tpu_custom_call.1} parent=1 // pred_region
      %s41 = ssub.s32 2048, 2048
      %42 = vsyncadd [#allocation6], %s41
      %s43 = sshll.u32 [#allocation7], 4
      %s44 = int_to_ptr.vmem [resolvable:$true] %s43
      %49 = dma.hbm_to_vmem [thread:$0]  %s2, 2048, %s44, [#allocation6], 128, 128, 8
    $region13: #{tpu_custom_call.1} parent=1 // pred_fallthru
      _
    // Predicated region
    $region14: #{tpu_custom_call.1} parent=1 // pred_check
      _
    $region15: #{tpu_custom_call.1} parent=1 // pred_check_branch
      %51 = sbr.rel (0) target = $region17
    $region16: #{tpu_custom_call.1} parent=1 // pred_region
      %s53 = ssub.s32 2048, 2048
      %54 = vsyncadd [#allocation9], %s53
      %s55 = sshll.u32 [#allocation8], 4
      %s56 = int_to_ptr.vmem [resolvable:$true] %s55
      %61 = dma.hbm_to_vmem [thread:$0]  %s3, 2048, %s56, [#allocation9], 128, 128, 8
    $region17: #{tpu_custom_call.1} parent=1 // pred_fallthru
      _
    // Predicated region
    $region18: #{tpu_custom_call.1} parent=1 // pred_check
      _
    $region19: #{tpu_custom_call.1} parent=1 // pred_check_branch
      %63 = sbr.rel (0) target = $region21
    $region20: #{tpu_custom_call.1} parent=1 // pred_region
      %s65 = ssub.s32 2048, 2048
      %66 = vsyncadd [#allocation9], %s65
      %s67 = sshll.u32 [#allocation10], 4
      %s68 = int_to_ptr.vmem [resolvable:$true] %s67
      %73 = dma.hbm_to_vmem [thread:$0]  %s4, 2048, %s68, [#allocation9], 128, 128, 8
    $region21: #{tpu_custom_call.1} parent=1 // pred_fallthru
      _
    // Predicated region
    $region22: #{tpu_custom_call.1} parent=1 // pred_check
      _
    $region23: #{tpu_custom_call.1} parent=1 // pred_check_branch
      %75 = sbr.rel (0) target = $region25
    $region24: #{tpu_custom_call.1} parent=1 // pred_region
      %76 = dma.done [#allocation3], 512
    $region25: #{tpu_custom_call.1} parent=1 // pred_fallthru
      _
    // Predicated region
    $region26: #{tpu_custom_call.1} parent=1 // pred_check
      _
    $region27: #{tpu_custom_call.1} parent=1 // pred_check_branch
      %78 = sbr.rel (0) target = $region29
    $region28: #{tpu_custom_call.1} parent=1 // pred_region
      %79 = dma.done [#allocation6], 256
    $region29: #{tpu_custom_call.1} parent=1 // pred_fallthru
      _
    // Predicated region
    $region30: #{tpu_custom_call.1} parent=1 // pred_check
      _
    $region31: #{tpu_custom_call.1} parent=1 // pred_check_branch
      %81 = sbr.rel (0) target = $region33
    $region32: #{tpu_custom_call.1} parent=1 // pred_region
      %82 = dma.done [#allocation6], 2048
    $region33: #{tpu_custom_call.1} parent=1 // pred_fallthru
      _
    // Predicated region
    $region34: #{tpu_custom_call.1} parent=1 // pred_check
      _
    $region35: #{tpu_custom_call.1} parent=1 // pred_check_branch
      %84 = sbr.rel (0) target = $region37
    $region36: #{tpu_custom_call.1} parent=1 // pred_region
      %85 = dma.done [#allocation9], 2048
    $region37: #{tpu_custom_call.1} parent=1 // pred_fallthru
      _
    // Predicated region
    $region38: #{tpu_custom_call.1} parent=1 // pred_check
      _
    $region39: #{tpu_custom_call.1} parent=1 // pred_check_branch
      %87 = sbr.rel (0) target = $region41
    $region40: #{tpu_custom_call.1} parent=1 // pred_region
      %88 = dma.done [#allocation9], 2048
    $region41: #{tpu_custom_call.1} parent=1 // pred_fallthru
      _
    %v89 = vld [vmem:[#allocation2] sm:$0xff]
    %v90 = vld [vmem:[#allocation2 + $0x8] sm:$0xff]
    %v91 = vld [vmem:[#allocation2 + $0x10] sm:$0xff]
    %v92 = vld [vmem:[#allocation2 + $0x18] sm:$0xff]
    %v93 = vld [vmem:[#allocation5] sm:$0xff]
    %v94 = vld [vmem:[#allocation5 + $0x8] sm:$0xff]
    %v95 = vld [vmem:[#allocation7] sm:$0xff]
    %v96 = vld [vmem:[#allocation7 + $0x8] sm:$0xff]
    %v97 = vld [vmem:[#allocation7 + $0x10] sm:$0xff]
    %v98 = vld [vmem:[#allocation7 + $0x18] sm:$0xff]
    %v99 = vld [vmem:[#allocation7 + $0x20] sm:$0xff]
    %v100 = vld [vmem:[#allocation7 + $0x28] sm:$0xff]
    %v101 = vld [vmem:[#allocation7 + $0x30] sm:$0xff]
    %v102 = vld [vmem:[#allocation7 + $0x38] sm:$0xff]
    %v103 = vld [vmem:[#allocation7 + $0x40] sm:$0xff]
    %v104 = vld [vmem:[#allocation7 + $0x48] sm:$0xff]
    %v105 = vld [vmem:[#allocation7 + $0x50] sm:$0xff]
    %v106 = vld [vmem:[#allocation7 + $0x58] sm:$0xff]
    %v107 = vld [vmem:[#allocation7 + $0x60] sm:$0xff]
    %v108 = vld [vmem:[#allocation7 + $0x68] sm:$0xff]
    %v109 = vld [vmem:[#allocation7 + $0x70] sm:$0xff]
    %v110 = vld [vmem:[#allocation7 + $0x78] sm:$0xff]
    %111 = vmatprep.subr.mxu0 0.0
    %112 = vmatpush1.msra.mxu0 %v95
    %113 = vmatprep.subr.mxu0 0.0
    %114 = vmatpush1.msra.mxu0 %v96
    %115 = vmatprep.subr.mxu0 0.0
    %116 = vmatpush1.msra.mxu0 %v97
    %117 = vmatprep.subr.mxu0 0.0
    %118 = vmatpush1.msra.mxu0 %v98
    %119 = vmatprep.subr.mxu0 0.0
    %120 = vmatpush1.msra.mxu0 %v99
    %121 = vmatprep.subr.mxu0 0.0
    %122 = vmatpush1.msra.mxu0 %v100
    %123 = vmatprep.subr.mxu0 0.0
    %124 = vmatpush1.msra.mxu0 %v101
    %125 = vmatprep.subr.mxu0 0.0
    %126 = vmatpush1.msra.mxu0 %v102
    %127 = vmatprep.subr.mxu0 0.0
    %128 = vmatpush1.msra.mxu0 %v103
    %129 = vmatprep.subr.mxu0 0.0
    %130 = vmatpush1.msra.mxu0 %v104
    %131 = vmatprep.subr.mxu0 0.0
    %132 = vmatpush1.msra.mxu0 %v105
    %133 = vmatprep.subr.mxu0 0.0
    %134 = vmatpush1.msra.mxu0 %v106
    %135 = vmatprep.subr.mxu0 0.0
    %136 = vmatpush1.msra.mxu0 %v107
    %137 = vmatprep.subr.mxu0 0.0
    %138 = vmatpush1.msra.mxu0 %v108
    %139 = vmatprep.subr.mxu0 0.0
    %140 = vmatpush1.msra.mxu0 %v109
    %141 = vmatprep.subr.mxu0 0.0
    %142 = vmatpush1.msra.mxu0 %v110
    %143 = vmatprep.subr.mxu0 0.0
    %144 = vmatpush1.msra.mxu0 0.0
    %145 = vmatprep.subr.mxu0 0.0
    %146 = vmatpush1.msra.mxu0 0.0
    %147 = vmatprep.subr.mxu0 0.0
    %148 = vmatpush1.msra.mxu0 0.0
    %149 = vmatprep.subr.mxu0 0.0
    %150 = vmatpush1.msra.mxu0 0.0
    %151 = vmatprep.subr.mxu0 0.0
    %152 = vmatpush1.msra.mxu0 0.0
    %153 = vmatprep.subr.mxu0 0.0
    %154 = vmatpush1.msra.mxu0 0.0
    %155 = vmatprep.subr.mxu0 0.0
    %156 = vmatpush1.msra.mxu0 0.0
    %157 = vmatprep.subr.mxu0 0.0
    %158 = vmatpush1.msra.mxu0 0.0
    %159 = vmatprep.subr.mxu0 0.0
    %160 = vmatpush1.msra.mxu0 0.0
    %161 = vmatprep.subr.mxu0 0.0
    %162 = vmatpush1.msra.mxu0 0.0
    %163 = vmatprep.subr.mxu0 0.0
    %164 = vmatpush1.msra.mxu0 0.0
    %165 = vmatprep.subr.mxu0 0.0
    %166 = vmatpush1.msra.mxu0 0.0
    %167 = vmatprep.subr.mxu0 0.0
    %168 = vmatpush1.msra.mxu0 0.0
    %169 = vmatprep.subr.mxu0 0.0
    %170 = vmatpush1.msra.mxu0 0.0
    %171 = vmatprep.subr.mxu0 0.0
    %172 = vmatpush1.msra.mxu0 0.0
    %173 = vmatprep.subr.mxu0 0.0
    %174 = vmatpush1.msra.mxu0 0.0
    %175 = vmatprep.mubr.f32.mxu0 0.0
    %176 = vmatmul.mubr.f32.gmra.mrb[0].mxu0 %v89
    %v177 = vpop.f32.mrb[0].mxu0
    %v178 = vadd.f32 0.0, %v177
    %v179 = vpop.f32.mrb[0].mxu0
    %180 = vmatprep.mubr.f32.mxu0 0.0
    %181 = vmatmul.mubr.f32.gmra.mrb[0].mxu0 %v90
    %v182 = vpop.f32.mrb[0].mxu0
    %v183 = vadd.f32 0.0, %v182
    %v184 = vpop.f32.mrb[0].mxu0
    %185 = vmatprep.mubr.f32.mxu0 0.0
    %186 = vmatmul.mubr.f32.gmra.mrb[0].mxu0 %v91
    %v187 = vpop.f32.mrb[0].mxu0
    %v188 = vadd.f32 0.0, %v187
    %v189 = vpop.f32.mrb[0].mxu0
    %190 = vmatprep.mubr.f32.mxu0 0.0
    %191 = vmatmul.mubr.f32.gmra.mrb[0].mxu0 %v92
    %v192 = vpop.f32.mrb[0].mxu0
    %v193 = vadd.f32 0.0, %v192
    %v194 = vpop.f32.mrb[0].mxu0
    %195 = vdwg.mxu0
    %v196 = vld [vmem:[#allocation8] sm:$0xff]
    %v197 = vld [vmem:[#allocation8 + $0x8] sm:$0xff]
    %v198 = vld [vmem:[#allocation8 + $0x10] sm:$0xff]
    %v199 = vld [vmem:[#allocation8 + $0x18] sm:$0xff]
    %v200 = vld [vmem:[#allocation8 + $0x20] sm:$0xff]
    %v201 = vld [vmem:[#allocation8 + $0x28] sm:$0xff]
    %v202 = vld [vmem:[#allocation8 + $0x30] sm:$0xff]
    %v203 = vld [vmem:[#allocation8 + $0x38] sm:$0xff]
    %v204 = vld [vmem:[#allocation8 + $0x40] sm:$0xff]
    %v205 = vld [vmem:[#allocation8 + $0x48] sm:$0xff]
    %v206 = vld [vmem:[#allocation8 + $0x50] sm:$0xff]
    %v207 = vld [vmem:[#allocation8 + $0x58] sm:$0xff]
    %v208 = vld [vmem:[#allocation8 + $0x60] sm:$0xff]
    %v209 = vld [vmem:[#allocation8 + $0x68] sm:$0xff]
    %v210 = vld [vmem:[#allocation8 + $0x70] sm:$0xff]
    %v211 = vld [vmem:[#allocation8 + $0x78] sm:$0xff]
    %212 = vmatprep.subr.mxu0 0.0
    %213 = vmatpush1.msra.mxu0 %v196
    %214 = vmatprep.subr.mxu0 0.0
    %215 = vmatpush1.msra.mxu0 %v197
    %216 = vmatprep.subr.mxu0 0.0
    %217 = vmatpush1.msra.mxu0 %v198
    %218 = vmatprep.subr.mxu0 0.0
    %219 = vmatpush1.msra.mxu0 %v199
    %220 = vmatprep.subr.mxu0 0.0
    %221 = vmatpush1.msra.mxu0 %v200
    %222 = vmatprep.subr.mxu0 0.0
    %223 = vmatpush1.msra.mxu0 %v201
    %224 = vmatprep.subr.mxu0 0.0
    %225 = vmatpush1.msra.mxu0 %v202
    %226 = vmatprep.subr.mxu0 0.0
    %227 = vmatpush1.msra.mxu0 %v203
    %228 = vmatprep.subr.mxu0 0.0
    %229 = vmatpush1.msra.mxu0 %v204
    %230 = vmatprep.subr.mxu0 0.0
    %231 = vmatpush1.msra.mxu0 %v205
    %232 = vmatprep.subr.mxu0 0.0
    %233 = vmatpush1.msra.mxu0 %v206
    %234 = vmatprep.subr.mxu0 0.0
    %235 = vmatpush1.msra.mxu0 %v207
    %236 = vmatprep.subr.mxu0 0.0
    %237 = vmatpush1.msra.mxu0 %v208
    %238 = vmatprep.subr.mxu0 0.0
    %239 = vmatpush1.msra.mxu0 %v209
    %240 = vmatprep.subr.mxu0 0.0
    %241 = vmatpush1.msra.mxu0 %v210
    %242 = vmatprep.subr.mxu0 0.0
    %243 = vmatpush1.msra.mxu0 %v211
    %244 = vmatprep.subr.mxu0 0.0
    %245 = vmatpush1.msra.mxu0 0.0
    %246 = vmatprep.subr.mxu0 0.0
    %247 = vmatpush1.msra.mxu0 0.0
    %248 = vmatprep.subr.mxu0 0.0
    %249 = vmatpush1.msra.mxu0 0.0
    %250 = vmatprep.subr.mxu0 0.0
    %251 = vmatpush1.msra.mxu0 0.0
    %252 = vmatprep.subr.mxu0 0.0
    %253 = vmatpush1.msra.mxu0 0.0
    %254 = vmatprep.subr.mxu0 0.0
    %255 = vmatpush1.msra.mxu0 0.0
    %256 = vmatprep.subr.mxu0 0.0
    %257 = vmatpush1.msra.mxu0 0.0
    %258 = vmatprep.subr.mxu0 0.0
    %259 = vmatpush1.msra.mxu0 0.0
    %260 = vmatprep.subr.mxu0 0.0
    %261 = vmatpush1.msra.mxu0 0.0
    %262 = vmatprep.subr.mxu0 0.0
    %263 = vmatpush1.msra.mxu0 0.0
    %264 = vmatprep.subr.mxu0 0.0
    %265 = vmatpush1.msra.mxu0 0.0
    %266 = vmatprep.subr.mxu0 0.0
    %267 = vmatpush1.msra.mxu0 0.0
    %268 = vmatprep.subr.mxu0 0.0
    %269 = vmatpush1.msra.mxu0 0.0
    %270 = vmatprep.subr.mxu0 0.0
    %271 = vmatpush1.msra.mxu0 0.0
    %272 = vmatprep.subr.mxu0 0.0
    %273 = vmatpush1.msra.mxu0 0.0
    %274 = vmatprep.subr.mxu0 0.0
    %275 = vmatpush1.msra.mxu0 0.0
    %276 = vmatprep.mubr.f32.mxu0 0.0
    %277 = vmatmul.mubr.f32.gmra.mrb[0].mxu0 %v93
    %v278 = vpop.f32.mrb[0].mxu0
    %v279 = vadd.f32 0.0, %v278
    %v280 = vpop.f32.mrb[0].mxu0
    %281 = vmatprep.mubr.f32.mxu0 0.0
    %282 = vmatmul.mubr.f32.gmra.mrb[0].mxu0 %v94
    %v283 = vpop.f32.mrb[0].mxu0
    %v284 = vadd.f32 0.0, %v283
    %v285 = vpop.f32.mrb[0].mxu0
    %286 = vdwg.mxu0
    %v287 = vld [vmem:[#allocation10] sm:$0xff]
    %v288 = vld [vmem:[#allocation10 + $0x8] sm:$0xff]
    %v289 = vld [vmem:[#allocation10 + $0x10] sm:$0xff]
    %v290 = vld [vmem:[#allocation10 + $0x18] sm:$0xff]
    %v291 = vld [vmem:[#allocation10 + $0x20] sm:$0xff]
    %v292 = vld [vmem:[#allocation10 + $0x28] sm:$0xff]
    %v293 = vld [vmem:[#allocation10 + $0x30] sm:$0xff]
    %v294 = vld [vmem:[#allocation10 + $0x38] sm:$0xff]
    %v295 = vld [vmem:[#allocation10 + $0x40] sm:$0xff]
    %v296 = vld [vmem:[#allocation10 + $0x48] sm:$0xff]
    %v297 = vld [vmem:[#allocation10 + $0x50] sm:$0xff]
    %v298 = vld [vmem:[#allocation10 + $0x58] sm:$0xff]
    %v299 = vld [vmem:[#allocation10 + $0x60] sm:$0xff]
    %v300 = vld [vmem:[#allocation10 + $0x68] sm:$0xff]
    %v301 = vld [vmem:[#allocation10 + $0x70] sm:$0xff]
    %v302 = vld [vmem:[#allocation10 + $0x78] sm:$0xff]
    %303 = vmatprep.subr.mxu0 0.0
    %304 = vmatpush1.msra.mxu0 %v287
    %305 = vmatprep.subr.mxu0 0.0
    %306 = vmatpush1.msra.mxu0 %v288
    %307 = vmatprep.subr.mxu0 0.0
    %308 = vmatpush1.msra.mxu0 %v289
    %309 = vmatprep.subr.mxu0 0.0
    %310 = vmatpush1.msra.mxu0 %v290
    %311 = vmatprep.subr.mxu0 0.0
    %312 = vmatpush1.msra.mxu0 %v291
    %313 = vmatprep.subr.mxu0 0.0
    %314 = vmatpush1.msra.mxu0 %v292
    %315 = vmatprep.subr.mxu0 0.0
    %316 = vmatpush1.msra.mxu0 %v293
    %317 = vmatprep.subr.mxu0 0.0
    %318 = vmatpush1.msra.mxu0 %v294
    %319 = vmatprep.subr.mxu0 0.0
    %320 = vmatpush1.msra.mxu0 %v295
    %321 = vmatprep.subr.mxu0 0.0
    %322 = vmatpush1.msra.mxu0 %v296
    %323 = vmatprep.subr.mxu0 0.0
    %324 = vmatpush1.msra.mxu0 %v297
    %325 = vmatprep.subr.mxu0 0.0
    %326 = vmatpush1.msra.mxu0 %v298
    %327 = vmatprep.subr.mxu0 0.0
    %328 = vmatpush1.msra.mxu0 %v299
    %329 = vmatprep.subr.mxu0 0.0
    %330 = vmatpush1.msra.mxu0 %v300
    %331 = vmatprep.subr.mxu0 0.0
    %332 = vmatpush1.msra.mxu0 %v301
    %333 = vmatprep.subr.mxu0 0.0
    %334 = vmatpush1.msra.mxu0 %v302
    %335 = vmatprep.subr.mxu0 0.0
    %336 = vmatpush1.msra.mxu0 0.0
    %337 = vmatprep.subr.mxu0 0.0
    %338 = vmatpush1.msra.mxu0 0.0
    %339 = vmatprep.subr.mxu0 0.0
    %340 = vmatpush1.msra.mxu0 0.0
    %341 = vmatprep.subr.mxu0 0.0
    %342 = vmatpush1.msra.mxu0 0.0
    %343 = vmatprep.subr.mxu0 0.0
    %344 = vmatpush1.msra.mxu0 0.0
    %345 = vmatprep.subr.mxu0 0.0
    %346 = vmatpush1.msra.mxu0 0.0
    %347 = vmatprep.subr.mxu0 0.0
    %348 = vmatpush1.msra.mxu0 0.0
    %349 = vmatprep.subr.mxu0 0.0
    %350 = vmatpush1.msra.mxu0 0.0
    %351 = vmatprep.subr.mxu0 0.0
    %352 = vmatpush1.msra.mxu0 0.0
    %353 = vmatprep.subr.mxu0 0.0
    %354 = vmatpush1.msra.mxu0 0.0
    %355 = vmatprep.subr.mxu0 0.0
    %356 = vmatpush1.msra.mxu0 0.0
    %357 = vmatprep.subr.mxu0 0.0
    %358 = vmatpush1.msra.mxu0 0.0
    %359 = vmatprep.subr.mxu0 0.0
    %360 = vmatpush1.msra.mxu0 0.0
    %361 = vmatprep.subr.mxu0 0.0
    %362 = vmatpush1.msra.mxu0 0.0
    %363 = vmatprep.subr.mxu0 0.0
    %364 = vmatpush1.msra.mxu0 0.0
    %365 = vmatprep.subr.mxu0 0.0
    %366 = vmatpush1.msra.mxu0 0.0
    %367 = vmatprep.mubr.f32.mxu0 0.0
    %368 = vmatmul.mubr.f32.gmra.mrb[0].mxu0 %v93
    %v369 = vpop.f32.mrb[0].mxu0
    %v370 = vadd.f32 0.0, %v369
    %v371 = vpop.f32.mrb[0].mxu0
    %372 = vmatprep.mubr.f32.mxu0 0.0
    %373 = vmatmul.mubr.f32.gmra.mrb[0].mxu0 %v94
    %v374 = vpop.f32.mrb[0].mxu0
    %v375 = vadd.f32 0.0, %v374
    %v376 = vpop.f32.mrb[0].mxu0
    %377 = vdwg.mxu0
    %v378 = vmul.f32 %v178, 0.17677669
    %v379 = vmul.f32 %v183, 0.17677669
    %v380 = vmul.f32 %v188, 0.17677669
    %v381 = vmul.f32 %v193, 0.17677669
    %382 = vmatprep.subr.mxu0 0.0
    %383 = vmatpush1.xpose.msra.mxu0 %v279
    %384 = vmatprep.subr.mxu0 0.0
    %385 = vmatpush1.xpose.msra.mxu0 0.0
    %386 = vmatprep.subr.mxu0 0.0
    %387 = vmatpush1.xpose.msra.mxu0 0.0
    %388 = vmatprep.subr.mxu0 0.0
    %389 = vmatpush1.xpose.msra.mxu0 0.0
    %390 = vmatprep.subr.mxu0 0.0
    %391 = vmatpush1.xpose.msra.mxu0 0.0
    %392 = vmatprep.subr.mxu0 0.0
    %393 = vmatpush1.xpose.msra.mxu0 0.0
    %394 = vmatprep.subr.mxu0 0.0
    %395 = vmatpush1.xpose.msra.mxu0 0.0
    %396 = vmatprep.subr.mxu0 0.0
    %397 = vmatpush1.xpose.msra.mxu0 0.0
    %398 = vmatprep.subr.mxu0 0.0
    %399 = vmatpush1.xpose.msra.mxu0 0.0
    %400 = vmatprep.subr.mxu0 0.0
    %401 = vmatpush1.xpose.msra.mxu0 0.0
    %402 = vmatprep.subr.mxu0 0.0
    %403 = vmatpush1.xpose.msra.mxu0 0.0
    %404 = vmatprep.subr.mxu0 0.0
    %405 = vmatpush1.xpose.msra.mxu0 0.0
    %406 = vmatprep.subr.mxu0 0.0
    %407 = vmatpush1.xpose.msra.mxu0 0.0
    %408 = vmatprep.subr.mxu0 0.0
    %409 = vmatpush1.xpose.msra.mxu0 0.0
    %410 = vmatprep.subr.mxu0 0.0
    %411 = vmatpush1.xpose.msra.mxu0 0.0
    %412 = vmatprep.subr.mxu0 0.0
    %413 = vmatpush1.xpose.msra.mxu0 0.0
    %414 = vmatprep.subr.mxu0 0.0
    %415 = vmatpush1.xpose.msra.mxu0 0.0
    %416 = vmatprep.subr.mxu0 0.0
    %417 = vmatpush1.xpose.msra.mxu0 0.0
    %418 = vmatprep.subr.mxu0 0.0
    %419 = vmatpush1.xpose.msra.mxu0 0.0
    %420 = vmatprep.subr.mxu0 0.0
    %421 = vmatpush1.xpose.msra.mxu0 0.0
    %422 = vmatprep.subr.mxu0 0.0
    %423 = vmatpush1.xpose.msra.mxu0 0.0
    %424 = vmatprep.subr.mxu0 0.0
    %425 = vmatpush1.xpose.msra.mxu0 0.0
    %426 = vmatprep.subr.mxu0 0.0
    %427 = vmatpush1.xpose.msra.mxu0 0.0
    %428 = vmatprep.subr.mxu0 0.0
    %429 = vmatpush1.xpose.msra.mxu0 0.0
    %430 = vmatprep.subr.mxu0 0.0
    %431 = vmatpush1.xpose.msra.mxu0 0.0
    %432 = vmatprep.subr.mxu0 0.0
    %433 = vmatpush1.xpose.msra.mxu0 0.0
    %434 = vmatprep.subr.mxu0 0.0
    %435 = vmatpush1.xpose.msra.mxu0 0.0
    %436 = vmatprep.subr.mxu0 0.0
    %437 = vmatpush1.xpose.msra.mxu0 0.0
    %438 = vmatprep.subr.mxu0 0.0
    %439 = vmatpush1.xpose.msra.mxu0 0.0
    %440 = vmatprep.subr.mxu0 0.0
    %441 = vmatpush1.xpose.msra.mxu0 0.0
    %442 = vmatprep.subr.mxu0 0.0
    %443 = vmatpush1.xpose.msra.mxu0 0.0
    %444 = vmatprep.subr.mxu0 0.0
    %445 = vmatpush1.xpose.msra.mxu0 0.0
    %446 = vmatprep.mubr.f32.mxu0 0.0
    %447 = vmatmul.mubr.f32.gmra.mrb[0].mxu0 %v378
    %v448 = vpop.f32.mrb[0].mxu0
    %v449 = vadd.f32 0.0, %v448
    %v450 = vpop.f32.mrb[0].mxu0
    %451 = vmatprep.mubr.f32.mxu0 0.0
    %452 = vmatmul.mubr.f32.gmra.mrb[0].mxu0 %v379
    %v453 = vpop.f32.mrb[0].mxu0
    %v454 = vadd.f32 0.0, %v453
    %v455 = vpop.f32.mrb[0].mxu0
    %456 = vdwg.mxu0
    %457 = vmatprep.subr.mxu0 0.0
    %458 = vmatpush1.xpose.msra.mxu0 %v284
    %459 = vmatprep.subr.mxu0 0.0
    %460 = vmatpush1.xpose.msra.mxu0 0.0
    %461 = vmatprep.subr.mxu0 0.0
    %462 = vmatpush1.xpose.msra.mxu0 0.0
    %463 = vmatprep.subr.mxu0 0.0
    %464 = vmatpush1.xpose.msra.mxu0 0.0
    %465 = vmatprep.subr.mxu0 0.0
    %466 = vmatpush1.xpose.msra.mxu0 0.0
    %467 = vmatprep.subr.mxu0 0.0
    %468 = vmatpush1.xpose.msra.mxu0 0.0
    %469 = vmatprep.subr.mxu0 0.0
    %470 = vmatpush1.xpose.msra.mxu0 0.0
    %471 = vmatprep.subr.mxu0 0.0
    %472 = vmatpush1.xpose.msra.mxu0 0.0
    %473 = vmatprep.subr.mxu0 0.0
    %474 = vmatpush1.xpose.msra.mxu0 0.0
    %475 = vmatprep.subr.mxu0 0.0
    %476 = vmatpush1.xpose.msra.mxu0 0.0
    %477 = vmatprep.subr.mxu0 0.0
    %478 = vmatpush1.xpose.msra.mxu0 0.0
    %479 = vmatprep.subr.mxu0 0.0
    %480 = vmatpush1.xpose.msra.mxu0 0.0
    %481 = vmatprep.subr.mxu0 0.0
    %482 = vmatpush1.xpose.msra.mxu0 0.0
    %483 = vmatprep.subr.mxu0 0.0
    %484 = vmatpush1.xpose.msra.mxu0 0.0
    %485 = vmatprep.subr.mxu0 0.0
    %486 = vmatpush1.xpose.msra.mxu0 0.0
    %487 = vmatprep.subr.mxu0 0.0
    %488 = vmatpush1.xpose.msra.mxu0 0.0
    %489 = vmatprep.subr.mxu0 0.0
    %490 = vmatpush1.xpose.msra.mxu0 0.0
    %491 = vmatprep.subr.mxu0 0.0
    %492 = vmatpush1.xpose.msra.mxu0 0.0
    %493 = vmatprep.subr.mxu0 0.0
    %494 = vmatpush1.xpose.msra.mxu0 0.0
    %495 = vmatprep.subr.mxu0 0.0
    %496 = vmatpush1.xpose.msra.mxu0 0.0
    %497 = vmatprep.subr.mxu0 0.0
    %498 = vmatpush1.xpose.msra.mxu0 0.0
    %499 = vmatprep.subr.mxu0 0.0
    %500 = vmatpush1.xpose.msra.mxu0 0.0
    %501 = vmatprep.subr.mxu0 0.0
    %502 = vmatpush1.xpose.msra.mxu0 0.0
    %503 = vmatprep.subr.mxu0 0.0
    %504 = vmatpush1.xpose.msra.mxu0 0.0
    %505 = vmatprep.subr.mxu0 0.0
    %506 = vmatpush1.xpose.msra.mxu0 0.0
    %507 = vmatprep.subr.mxu0 0.0
    %508 = vmatpush1.xpose.msra.mxu0 0.0
    %509 = vmatprep.subr.mxu0 0.0
    %510 = vmatpush1.xpose.msra.mxu0 0.0
    %511 = vmatprep.subr.mxu0 0.0
    %512 = vmatpush1.xpose.msra.mxu0 0.0
    %513 = vmatprep.subr.mxu0 0.0
    %514 = vmatpush1.xpose.msra.mxu0 0.0
    %515 = vmatprep.subr.mxu0 0.0
    %516 = vmatpush1.xpose.msra.mxu0 0.0
    %517 = vmatprep.subr.mxu0 0.0
    %518 = vmatpush1.xpose.msra.mxu0 0.0
    %519 = vmatprep.subr.mxu0 0.0
    %520 = vmatpush1.xpose.msra.mxu0 0.0
    %521 = vmatprep.mubr.f32.mxu0 0.0
    %522 = vmatmul.mubr.f32.gmra.mrb[0].mxu0 %v380
    %v523 = vpop.f32.mrb[0].mxu0
    %v524 = vadd.f32 0.0, %v523
    %v525 = vpop.f32.mrb[0].mxu0
    %526 = vmatprep.mubr.f32.mxu0 0.0
    %527 = vmatmul.mubr.f32.gmra.mrb[0].mxu0 %v381
    %v528 = vpop.f32.mrb[0].mxu0
    %v529 = vadd.f32 0.0, %v528
    %v530 = vpop.f32.mrb[0].mxu0
    %531 = vdwg.mxu0
    %vm532 = vcmask 64512
    %v533 = vsel %vm532, %v449, -inf
    %534 = vmax.xlane.f32.xlu0 %v533
    %v535 = vpop.xlane.xlu0 %534
    %v536 = vsel %vm532, %v454, -inf
    %537 = vmax.xlane.f32.xlu0 %v536
    %v538 = vpop.xlane.xlu0 %537
    %v539 = vsel %vm532, %v524, -inf
    %540 = vmax.xlane.f32.xlu0 %v539
    %v541 = vpop.xlane.xlu0 %540
    %v542 = vsel %vm532, %v529, -inf
    %543 = vmax.xlane.f32.xlu0 %v542
    %v544 = vpop.xlane.xlu0 %543
    %v545 = vsub.f32 %v449, %v535
    %v546 = vsub.f32 %v454, %v538
    %v547 = vsub.f32 %v524, %v541
    %v548 = vsub.f32 %v529, %v544
    %v549 = vmul.f32 %v545, 1.442695
    %v550 = vpow.pop %v549
    %v551 = vmul.f32 %v546, 1.442695
    %v552 = vpow.pop %v551
    %v553 = vmul.f32 %v547, 1.442695
    %v554 = vpow.pop %v553
    %v555 = vmul.f32 %v548, 1.442695
    %v556 = vpow.pop %v555
    %v557 = vsel %vm532, %v550, 0.0
    %558 = vadd.xlane.f32.xlu0 %v557
    %v559 = vpop.xlane.xlu0 %558
    %v560 = vsel %vm532, %v552, 0.0
    %561 = vadd.xlane.f32.xlu0 %v560
    %v562 = vpop.xlane.xlu0 %561
    %v563 = vsel %vm532, %v554, 0.0
    %564 = vadd.xlane.f32.xlu0 %v563
    %v565 = vpop.xlane.xlu0 %564
    %v566 = vsel %vm532, %v556, 0.0
    %567 = vadd.xlane.f32.xlu0 %v566
    %v568 = vpop.xlane.xlu0 %567
    %v569 = vrcp.pop %v559
    %v570 = vrcp.pop %v562
    %v571 = vrcp.pop %v565
    %v572 = vrcp.pop %v568
    %v573 = vmul.f32 %v559, %v569
    %v574 = vmul.f32 %v562, %v570
    %v575 = vmul.f32 %v565, %v571
    %v576 = vmul.f32 %v568, %v572
    %v577 = vsub.f32 2.0, %v573
    %v578 = vsub.f32 2.0, %v574
    %v579 = vsub.f32 2.0, %v575
    %v580 = vsub.f32 2.0, %v576
    %v581 = vmul.f32 %v569, %v577
    %v582 = vmul.f32 %v570, %v578
    %v583 = vmul.f32 %v571, %v579
    %v584 = vmul.f32 %v572, %v580
    %v585 = vmul.f32 %v550, %v581
    %v586 = vmul.f32 %v552, %v582
    %v587 = vmul.f32 %v554, %v583
    %v588 = vmul.f32 %v556, %v584
    %v590 = vsel %vm532, %v585, 0
    %v593 = vsel %vm532, %v586, 0
    %595 = vmatprep.subr.mxu0 0.0
    %596 = vmatpush1.msra.mxu0 %v370
    %597 = vmatprep.subr.mxu0 0.0
    %598 = vmatpush1.msra.mxu0 0.0
    %599 = vmatprep.subr.mxu0 0.0
    %600 = vmatpush1.msra.mxu0 0.0
    %601 = vmatprep.subr.mxu0 0.0
    %602 = vmatpush1.msra.mxu0 0.0
    %603 = vmatprep.subr.mxu0 0.0
    %604 = vmatpush1.msra.mxu0 0.0
    %605 = vmatprep.subr.mxu0 0.0
    %606 = vmatpush1.msra.mxu0 0.0
    %607 = vmatprep.subr.mxu0 0.0
    %608 = vmatpush1.msra.mxu0 0.0
    %609 = vmatprep.subr.mxu0 0.0
    %610 = vmatpush1.msra.mxu0 0.0
    %611 = vmatprep.subr.mxu0 0.0
    %612 = vmatpush1.msra.mxu0 0.0
    %613 = vmatprep.subr.mxu0 0.0
    %614 = vmatpush1.msra.mxu0 0.0
    %615 = vmatprep.subr.mxu0 0.0
    %616 = vmatpush1.msra.mxu0 0.0
    %617 = vmatprep.subr.mxu0 0.0
    %618 = vmatpush1.msra.mxu0 0.0
    %619 = vmatprep.subr.mxu0 0.0
    %620 = vmatpush1.msra.mxu0 0.0
    %621 = vmatprep.subr.mxu0 0.0
    %622 = vmatpush1.msra.mxu0 0.0
    %623 = vmatprep.subr.mxu0 0.0
    %624 = vmatpush1.msra.mxu0 0.0
    %625 = vmatprep.subr.mxu0 0.0
    %626 = vmatpush1.msra.mxu0 0.0
    %627 = vmatprep.subr.mxu0 0.0
    %628 = vmatpush1.msra.mxu0 0.0
    %629 = vmatprep.subr.mxu0 0.0
    %630 = vmatpush1.msra.mxu0 0.0
    %631 = vmatprep.subr.mxu0 0.0
    %632 = vmatpush1.msra.mxu0 0.0
    %633 = vmatprep.subr.mxu0 0.0
    %634 = vmatpush1.msra.mxu0 0.0
    %635 = vmatprep.subr.mxu0 0.0
    %636 = vmatpush1.msra.mxu0 0.0
    %637 = vmatprep.subr.mxu0 0.0
    %638 = vmatpush1.msra.mxu0 0.0
    %639 = vmatprep.subr.mxu0 0.0
    %640 = vmatpush1.msra.mxu0 0.0
    %641 = vmatprep.subr.mxu0 0.0
    %642 = vmatpush1.msra.mxu0 0.0
    %643 = vmatprep.subr.mxu0 0.0
    %644 = vmatpush1.msra.mxu0 0.0
    %645 = vmatprep.subr.mxu0 0.0
    %646 = vmatpush1.msra.mxu0 0.0
    %647 = vmatprep.subr.mxu0 0.0
    %648 = vmatpush1.msra.mxu0 0.0
    %649 = vmatprep.subr.mxu0 0.0
    %650 = vmatpush1.msra.mxu0 0.0
    %651 = vmatprep.subr.mxu0 0.0
    %652 = vmatpush1.msra.mxu0 0.0
    %653 = vmatprep.subr.mxu0 0.0
    %654 = vmatpush1.msra.mxu0 0.0
    %655 = vmatprep.subr.mxu0 0.0
    %656 = vmatpush1.msra.mxu0 0.0
    %657 = vmatprep.subr.mxu0 0.0
    %658 = vmatpush1.msra.mxu0 0.0
    %659 = vmatprep.mubr.f32.mxu0 0.0
    %660 = vmatmul.mubr.f32.gmra.mrb[0].mxu0 %v590
    %v661 = vpop.f32.mrb[0].mxu0
    %v662 = vadd.f32 0.0, %v661
    %v663 = vpop.f32.mrb[0].mxu0
    %664 = vmatprep.mubr.f32.mxu0 0.0
    %665 = vmatmul.mubr.f32.gmra.mrb[0].mxu0 %v593
    %v666 = vpop.f32.mrb[0].mxu0
    %v667 = vadd.f32 0.0, %v666
    %v668 = vpop.f32.mrb[0].mxu0
    %669 = vdwg.mxu0
    %v671 = vsel %vm532, %v587, 0
    %v674 = vsel %vm532, %v588, 0
    %676 = vmatprep.subr.mxu0 0.0
    %677 = vmatpush1.msra.mxu0 %v375
    %678 = vmatprep.subr.mxu0 0.0
    %679 = vmatpush1.msra.mxu0 0.0
    %680 = vmatprep.subr.mxu0 0.0
    %681 = vmatpush1.msra.mxu0 0.0
    %682 = vmatprep.subr.mxu0 0.0
    %683 = vmatpush1.msra.mxu0 0.0
    %684 = vmatprep.subr.mxu0 0.0
    %685 = vmatpush1.msra.mxu0 0.0
    %686 = vmatprep.subr.mxu0 0.0
    %687 = vmatpush1.msra.mxu0 0.0
    %688 = vmatprep.subr.mxu0 0.0
    %689 = vmatpush1.msra.mxu0 0.0
    %690 = vmatprep.subr.mxu0 0.0
    %691 = vmatpush1.msra.mxu0 0.0
    %692 = vmatprep.subr.mxu0 0.0
    %693 = vmatpush1.msra.mxu0 0.0
    %694 = vmatprep.subr.mxu0 0.0
    %695 = vmatpush1.msra.mxu0 0.0
    %696 = vmatprep.subr.mxu0 0.0
    %697 = vmatpush1.msra.mxu0 0.0
    %698 = vmatprep.subr.mxu0 0.0
    %699 = vmatpush1.msra.mxu0 0.0
    %700 = vmatprep.subr.mxu0 0.0
    %701 = vmatpush1.msra.mxu0 0.0
    %702 = vmatprep.subr.mxu0 0.0
    %703 = vmatpush1.msra.mxu0 0.0
    %704 = vmatprep.subr.mxu0 0.0
    %705 = vmatpush1.msra.mxu0 0.0
    %706 = vmatprep.subr.mxu0 0.0
    %707 = vmatpush1.msra.mxu0 0.0
    %708 = vmatprep.subr.mxu0 0.0
    %709 = vmatpush1.msra.mxu0 0.0
    %710 = vmatprep.subr.mxu0 0.0
    %711 = vmatpush1.msra.mxu0 0.0
    %712 = vmatprep.subr.mxu0 0.0
    %713 = vmatpush1.msra.mxu0 0.0
    %714 = vmatprep.subr.mxu0 0.0
    %715 = vmatpush1.msra.mxu0 0.0
    %716 = vmatprep.subr.mxu0 0.0
    %717 = vmatpush1.msra.mxu0 0.0
    %718 = vmatprep.subr.mxu0 0.0
    %719 = vmatpush1.msra.mxu0 0.0
    %720 = vmatprep.subr.mxu0 0.0
    %721 = vmatpush1.msra.mxu0 0.0
    %722 = vmatprep.subr.mxu0 0.0
    %723 = vmatpush1.msra.mxu0 0.0
    %724 = vmatprep.subr.mxu0 0.0
    %725 = vmatpush1.msra.mxu0 0.0
    %726 = vmatprep.subr.mxu0 0.0
    %727 = vmatpush1.msra.mxu0 0.0
    %728 = vmatprep.subr.mxu0 0.0
    %729 = vmatpush1.msra.mxu0 0.0
    %730 = vmatprep.subr.mxu0 0.0
    %731 = vmatpush1.msra.mxu0 0.0
    %732 = vmatprep.subr.mxu0 0.0
    %733 = vmatpush1.msra.mxu0 0.0
    %734 = vmatprep.subr.mxu0 0.0
    %735 = vmatpush1.msra.mxu0 0.0
    %736 = vmatprep.subr.mxu0 0.0
    %737 = vmatpush1.msra.mxu0 0.0
    %738 = vmatprep.subr.mxu0 0.0
    %739 = vmatpush1.msra.mxu0 0.0
    %740 = vmatprep.mubr.f32.mxu0 0.0
    %741 = vmatmul.mubr.f32.gmra.mrb[0].mxu0 %v671
    %v742 = vpop.f32.mrb[0].mxu0
    %v743 = vadd.f32 0.0, %v742
    %v744 = vpop.f32.mrb[0].mxu0
    %745 = vmatprep.mubr.f32.mxu0 0.0
    %746 = vmatmul.mubr.f32.gmra.mrb[0].mxu0 %v674
    %v747 = vpop.f32.mrb[0].mxu0
    %v748 = vadd.f32 0.0, %v747
    %v749 = vpop.f32.mrb[0].mxu0
    %750 = vdwg.mxu0
    %751 = vst [vmem:[#allocation11] sm:$0xff] %v662
    %752 = vst [vmem:[#allocation11 + $0x8] sm:$0xff] %v667
    %753 = vst [vmem:[#allocation11 + $0x10] sm:$0xff] %v743
    %754 = vst [vmem:[#allocation11 + $0x18] sm:$0xff] %v748
    // Predicated region
    $region42: #{tpu_custom_call.1} parent=1 // pred_check
      _
    $region43: #{tpu_custom_call.1} parent=1 // pred_check_branch
      %756 = sbr.rel (0) target = $region45
    $region44: #{tpu_custom_call.1} parent=1 // pred_region
      %s758 = ssub.s32 512, 512
      %759 = vsyncadd [#allocation4], %s758
      %s760 = sshll.u32 [#allocation11], 4
      %s761 = int_to_ptr.vmem [resolvable:$true] %s760
      %766 = dma.vmem_to_hbm [thread:$0]  %s761, 512, %s5, [#allocation4], 128, 128, 8
    $region45: #{tpu_custom_call.1} parent=1 // pred_fallthru
      _
    // Predicated region
    $region46: #{tpu_custom_call.1} parent=1 // pred_check
      _
    $region47: #{tpu_custom_call.1} parent=1 // pred_check_branch
      %768 = sbr.rel (0) target = $region49
    $region48: #{tpu_custom_call.1} parent=1 // pred_region
      %769 = dma.done [#allocation4], 512
    $region49: #{tpu_custom_call.1} parent=1 // pred_fallthru
      _
    %770 = vsyncpa [#allocation3], 1
    %771 = vsyncpa [#allocation6], 1
    %772 = vsyncpa [#allocation9], 1
    %773 = vsyncpa [#allocation4], 1

</llo_original>
